<compile_context>
chip_gen: v7x
topology: tpu7x:2x2x1
jax: 0.10.0
libtpu: 0.0.40
codegen_flags: <defaults>
</compile_context>

<pallas_src>
import jax
import jax.numpy as jnp
from jax.experimental import pallas as pl
from jax.experimental.pallas import tpu as pltpu


def _attention_pool_kernel(x_ref, mask_ref, w_ref, b_ref, o_ref):
    # x_ref:    (Bt, T, D)  VMEM
    # mask_ref: (Bt, T)     VMEM
    # w_ref:    (1, D)      VMEM, f32 (lane-dense Linear weight row)
    # b_ref:    (1,)        SMEM, f32 (Linear bias scalar)
    # o_ref:    (Bt, D)     VMEM
    x = x_ref[...]                                   # (Bt, T, D)
    xf = x.astype(jnp.float32)
    w_row = w_ref[...]                               # (1, D) f32
    b = b_ref[0]                                     # scalar f32

    # fc: Linear(D -> 1) + bias + ReLU, computed lane-dense as (Bt, T).
    # VPU broadcast-multiply + lane reduce over D (keeps the N=1 matmul off the MXU).
    score = jnp.sum(xf * w_row, axis=-1) + b         # (Bt, T) f32
    score = jnp.maximum(score, 0.0)                  # ReLU

    # additive mask (single cast, fused -1e4 multiply)
    score = score + mask_ref[...].astype(jnp.float32) * (-10000.0)

    # softmax over T (lanes)
    m = jnp.max(score, axis=-1, keepdims=True)       # (Bt, 1)
    p = jnp.exp(score - m)                           # (Bt, T)
    denom = jnp.sum(p, axis=-1, keepdims=True)       # (Bt, 1)
    norm = p * pl.reciprocal(denom, approx=False)    # (Bt, T)

    # pooling: (Bt, 1, T) @ (Bt, T, D) -> (Bt, 1, D) on the MXU, f32 accumulate
    out = jnp.einsum(
        "bqt,btd->bqd",
        norm[:, None, :].astype(x.dtype), x,
        preferred_element_type=jnp.float32,
    )                                                # (Bt, 1, D)
    o_ref[...] = out[:, 0, :].astype(o_ref.dtype)


def _choose_block_batch(B, T, D, itemsize, target_bytes=4 << 20):
    """Rows per grid step: big enough to amortize per-step overhead and keep DMAs
    lane/sublane-dense, small enough that double-buffered x tiles fit the v7x
    64 MiB VMEM (default ~32 MiB scoped limit)."""
    row_bytes = max(T * D * itemsize, 1)
    bt = max(1, target_bytes // row_bytes)
    if bt >= B:
        # Whole batch fits one tile. If the batch is big enough, keep >= 2 grid
        # steps so both v7x TensorCores get work.
        if B >= 16:
            return max(8, (B // 2) // 8 * 8)
        return B
    return max(8, int(bt) // 8 * 8)


def attention_pool(x, mask, weight, bias):
    """x: [B, T, D], mask: [B, T] (or None), weight: [1, D], bias: [1] -> [B, D]"""
    B, T, D = x.shape
    if mask is None:
        mask = jnp.zeros((B, T), dtype=x.dtype)

    Bt = _choose_block_batch(B, T, D, jnp.dtype(x.dtype).itemsize)
    B_pad = -(-B // Bt) * Bt
    if B_pad != B:
        # Padded rows (x = 0, mask = 0) produce finite garbage and are sliced off.
        x = jnp.pad(x, ((0, B_pad - B), (0, 0), (0, 0)))
        mask = jnp.pad(mask, ((0, B_pad - B), (0, 0)))

    w_row = jnp.asarray(weight).reshape(1, D).astype(jnp.float32)   # lane-dense (1, D)
    b_smem = jnp.asarray(bias).reshape(1).astype(jnp.float32)       # scalar in SMEM

    out = pl.pallas_call(
        _attention_pool_kernel,
        out_shape=jax.ShapeDtypeStruct((B_pad, D), x.dtype),
        grid_spec=pltpu.PrefetchScalarGridSpec(
            num_scalar_prefetch=0,
            grid=(B_pad // Bt,),
            in_specs=[
                pl.BlockSpec((Bt, T, D), lambda i: (i, 0, 0)),                 # x
                pl.BlockSpec((Bt, T), lambda i: (i, 0)),                       # mask
                pl.BlockSpec((1, D), lambda i: (0, 0)),                        # weight row
                pl.BlockSpec(memory_space=pltpu.MemorySpace.SMEM),             # bias
            ],
            out_specs=pl.BlockSpec((Bt, D), lambda i: (i, 0)),
        ),
        compiler_params=pltpu.CompilerParams(
            dimension_semantics=("parallel",),
        ),
    )(x, mask, w_row, b_smem)

    return out[:B] if B_pad != B else out


def attention_pool_ref(x, mask, weight, bias):
    """Pure-JAX reference mirroring the PyTorch forward."""
    score = jnp.maximum(jnp.einsum("btd,od->bto", x, weight) + bias, 0.0)[..., 0]
    if mask is not None:
        score = score + mask.astype(x.dtype) * (-10000.0)
    norm = jax.nn.softmax(score, axis=1)
    return jnp.einsum("bt,btd->bd", norm, x)


if __name__ == "__main__":
    root = jax.random.PRNGKey(0)

    def run_case(tag, B, T, D):
        key = jax.random.fold_in(root, B * 100000 + T * 1000 + D)
        kx, kw, kb, km = jax.random.split(key, 4)
        x = jax.random.normal(kx, (B, T, D), dtype=jnp.float32)
        weight = jax.random.normal(kw, (1, D), dtype=jnp.float32) * 0.1
        bias = jax.random.normal(kb, (1,), dtype=jnp.float32) * 0.1
        mask = (jax.random.uniform(km, (B, T)) > 0.7).astype(jnp.float32)

        out = jax.block_until_ready(attention_pool(x, mask, weight, bias))
        ref = attention_pool_ref(x, mask, weight, bias)
        assert out.shape == (B, D)
        err = float(jnp.max(jnp.abs(out - ref)))
        assert jnp.allclose(out, ref, atol=2e-5, rtol=2e-5), (
            f"[{tag}] max abs err {err}")

    # tiny: single grid step, Bt == B
    run_case("tiny", 2, 8, 32)
    # multi-step: Bt = 8, batch padded 18 -> 24, 3 grid steps (exercises tiling path)
    run_case("tiled", 18, 16, 128)

    # TODO(synk): nn.Dropout with drop > 0 (training mode) is not implemented;
    # the module default drop=0.0 makes it an identity, which is what is modeled.
    print("KERNEL_OK")
</pallas_src>

<mosaic_0001>
module attributes {stable_mosaic.version = 11 : i64} {
  func.func @_attention_pool_kernel(%arg0: i32, %arg1: memref<2x8x32xf32, #tpu.memory_space<vmem>>, %arg2: memref<2x8xf32, #tpu.memory_space<vmem>>, %arg3: memref<1x32xf32, #tpu.memory_space<vmem>>, %arg4: memref<1xf32, #tpu.memory_space<smem>>, %arg5: memref<2x32xf32, #tpu.memory_space<vmem>>) attributes {dimension_semantics = [#tpu.dimension_semantics<parallel>], iteration_bounds = array<i64: 1>, scalar_prefetch = 0 : i64, scratch_operands = 0 : i64, tpu.core_type = #tpu.core_type<tc>, window_params = [{transform_indices = @transform_0, window_bounds = array<i64: 2, 8, 32>}, {transform_indices = @transform_1, window_bounds = array<i64: 2, 8>}, {pipeline_mode = #tpu.pipeline_mode<synchronous>, transform_indices = @transform_2, window_bounds = array<i64: 1, 32>}, {transform_indices = @transform_3, window_bounds = array<i64: 1>}, {transform_indices = @transform_4, window_bounds = array<i64: 2, 32>}]} {
    %c0 = arith.constant 0 : index
    %c0_0 = arith.constant 0 : index
    %c0_1 = arith.constant 0 : index
    %0 = vector.load %arg1[%c0, %c0_0, %c0_1] : memref<2x8x32xf32, #tpu.memory_space<vmem>>, vector<2x8x32xf32>
    %c0_2 = arith.constant 0 : index
    %c0_3 = arith.constant 0 : index
    %1 = vector.load %arg3[%c0_2, %c0_3] : memref<1x32xf32, #tpu.memory_space<vmem>>, vector<1x32xf32>
    %c0_4 = arith.constant 0 : index
    %2 = memref.load %arg4[%c0_4] : memref<1xf32, #tpu.memory_space<smem>>
    %3 = vector.shape_cast %1 : vector<1x32xf32> to vector<1x1x32xf32>
    %4 = vector.broadcast %3 : vector<1x1x32xf32> to vector<2x8x32xf32>
    %5 = arith.mulf %0, %4 : vector<2x8x32xf32>
    %cst = arith.constant dense<0.000000e+00> : vector<2x8xf32>
    %6 = vector.multi_reduction <add>, %5, %cst [2] : vector<2x8x32xf32> to vector<2x8xf32>
    %7 = vector.broadcast %2 : f32 to vector<2x8xf32>
    %8 = arith.addf %6, %7 : vector<2x8xf32>
    %cst_5 = arith.constant 0.000000e+00 : f32
    %9 = vector.broadcast %cst_5 : f32 to vector<2x8xf32>
    %10 = arith.maximumf %8, %9 : vector<2x8xf32>
    %c0_6 = arith.constant 0 : index
    %c0_7 = arith.constant 0 : index
    %11 = vector.load %arg2[%c0_6, %c0_7] : memref<2x8xf32, #tpu.memory_space<vmem>>, vector<2x8xf32>
    %cst_8 = arith.constant -1.000000e+04 : f32
    %12 = vector.broadcast %cst_8 : f32 to vector<2x8xf32>
    %13 = arith.mulf %11, %12 : vector<2x8xf32>
    %14 = arith.addf %10, %13 : vector<2x8xf32>
    %cst_9 = arith.constant dense<0xFF800000> : vector<2xf32>
    %15 = vector.multi_reduction <maximumf>, %14, %cst_9 [1] : vector<2x8xf32> to vector<2xf32>
    %16 = vector.shape_cast %15 : vector<2xf32> to vector<2x1xf32>
    %17 = vector.broadcast %16 : vector<2x1xf32> to vector<2x8xf32>
    %18 = arith.subf %14, %17 : vector<2x8xf32>
    %19 = math.exp %18 : vector<2x8xf32>
    %cst_10 = arith.constant dense<0.000000e+00> : vector<2xf32>
    %20 = vector.multi_reduction <add>, %19, %cst_10 [1] : vector<2x8xf32> to vector<2xf32>
    %21 = vector.shape_cast %20 : vector<2xf32> to vector<2x1xf32>
    %22 = tpu.reciprocal %21 : vector<2x1xf32> -> vector<2x1xf32>
    %23 = vector.broadcast %22 : vector<2x1xf32> to vector<2x8xf32>
    %24 = arith.mulf %19, %23 : vector<2x8xf32>
    %25 = vector.shape_cast %24 : vector<2x8xf32> to vector<2x1x8xf32>
    "tpu.trace_start"() <{level = 10 : i32, message = "bqt,btd->bqd"}> : () -> ()
    %cst_11 = arith.constant dense<0.000000e+00> : vector<2x1x32xf32>
    %26 = tpu.matmul %25, %0, %cst_11 {dimension_numbers = #tpu.dot_dimension_numbers<[2], [1], [1], [2], [0, 0, 0, 1, 1, 2], [0], [0]>} : vector<2x1x8xf32>, vector<2x8x32xf32>, vector<2x1x32xf32> -> vector<2x1x32xf32>
    "tpu.trace_stop"() : () -> ()
    %27 = vector.shape_cast %26 : vector<2x1x32xf32> to vector<2x32xf32>
    %c0_12 = arith.constant 0 : index
    %c0_13 = arith.constant 0 : index
    %28 = vector.load %arg5[%c0_12, %c0_13] : memref<2x32xf32, #tpu.memory_space<vmem>>, vector<2x32xf32>
    tpu.vector_store %arg5[%c0_12, %c0_13], %27 {strides = array<i32>} : memref<2x32xf32, #tpu.memory_space<vmem>>, vector<2x32xf32>,
    return
  }
  func.func @transform_0(%arg0: i32) -> (i32, i32, i32) {
    %c0_i32 = arith.constant 0 : i32
    %c0_i32_0 = arith.constant 0 : i32
    %c0_i32_1 = arith.constant 0 : i32
    return %arg0, %c0_i32, %c0_i32_0 : i32, i32, i32
  }
  func.func @transform_1(%arg0: i32) -> (i32, i32) {
    %c0_i32 = arith.constant 0 : i32
    %c0_i32_0 = arith.constant 0 : i32
    return %arg0, %c0_i32 : i32, i32
  }
  func.func @transform_2(%arg0: i32) -> (i32, i32) {
    %c0_i32 = arith.constant 0 : i32
    %c0_i32_0 = arith.constant 0 : i32
    %c0_i32_1 = arith.constant 0 : i32
    return %c0_i32, %c0_i32_0 : i32, i32
  }
  func.func @transform_3(%arg0: i32) -> i32 {
    %c0_i32 = arith.constant 0 : i32
    %c0_i32_0 = arith.constant 0 : i32
    return %c0_i32 : i32
  }
  func.func @transform_4(%arg0: i32) -> (i32, i32) {
    %c0_i32 = arith.constant 0 : i32
    %c0_i32_0 = arith.constant 0 : i32
    return %arg0, %c0_i32 : i32, i32
  }
}

</mosaic_0001>

<llo_original>
// kernel: tpu_custom_call.1
$region0: #{tpu_custom_call.1}
  #allocation0 [shape = 'u32[]', space=smem, size = 0x4, offset = 0x4, fixed_abs, tag = 'smem constant byte address 0x4 - core index']
  #allocation1 [shape = 'u32[144,128]{1,0:T(1,128)}', space=vmem, size = 0x12000, scoped, tag = 'internal scratch']
  #allocation2 [shape = 'f32[1]{0:T(128)S(6)}', space=smem, size = 0x200, scoped, tag = 'scoped memory for tpu_custom_call.1']
  %s0 = inlined_call_operand.hbm [shape: f32[2,8,32], index: 0, kind: input, shape index: {}]
  %s1 = inlined_call_operand.vmem [shape: f32[2,8], index: 1, kind: input, shape index: {}]
  %s2 = inlined_call_operand.vmem [shape: f32[1,32], index: 2, kind: input, shape index: {}]
  %s3 = inlined_call_operand.<no memory space> [shape: f32[1], index: 3, kind: input, shape index: {}]
  %s4 = inlined_call_operand.hbm [shape: f32[2,32], index: 4, kind: output, shape index: {}]
  %s5 = sld [smem:[#allocation0]]
  $region30: #{tpu_custom_call.1} parent=0
    _
  %s7 = ssub.s32 1, %s5
  %s8 = scalar_select 0, %s7, %s5
  %9 = sst [smem:[#allocation2]] %s3
  $region1: #{tpu_custom_call.1} parent=0
    #allocation3 [shape = 'u8[8192]{0}', space=vmem, size = 0x2000, scoped, tag = 'input window, operand 0, single buffered']
    #allocation4 [shape = 's32[1]{0}', space=sflag, size = 0x4, scoped, tag = 'scoped memory for tpu_custom_call.1']
    #allocation5 [shape = 's32[1]{0}', space=sflag, size = 0x4, scoped, tag = 'scoped memory for tpu_custom_call.1']
    #allocation6 [shape = 'u8[1024]{0}', space=vmem, size = 0x400, scoped, tag = 'output window, operand 0, single buffered']
    %10 = vsyncpa [#allocation4], 0
    %11 = vsyncpa [#allocation5], 0
    // Predicated region
    $region2: #{tpu_custom_call.1} parent=1 // pred_check
      _
    $region3: #{tpu_custom_call.1} parent=1 // pred_check_branch
      %13 = sbr.rel (0) target = $region5
    $region4: #{tpu_custom_call.1} parent=1 // pred_region
      %s15 = ssub.s32 256, 256
      %16 = vsyncadd [#allocation4], %s15
      %s17 = sshll.u32 [#allocation3], 4
      %s18 = int_to_ptr.vmem [resolvable:$true] %s17
      %23 = dma.hbm_to_vmem [thread:$0]  %s0, 256, %s18, [#allocation4], 128, 128, 8
    $region5: #{tpu_custom_call.1} parent=1 // pred_fallthru
      _
    // Predicated region
    $region6: #{tpu_custom_call.1} parent=1 // pred_check
      _
    $region7: #{tpu_custom_call.1} parent=1 // pred_check_branch
      %25 = sbr.rel (0) target = $region9
    $region8: #{tpu_custom_call.1} parent=1 // pred_region
      _
    $region9: #{tpu_custom_call.1} parent=1 // pred_fallthru
      _
    // Predicated region
    $region10: #{tpu_custom_call.1} parent=1 // pred_check
      _
    $region11: #{tpu_custom_call.1} parent=1 // pred_check_branch
      %27 = sbr.rel (0) target = $region13
    $region12: #{tpu_custom_call.1} parent=1 // pred_region
      _
    $region13: #{tpu_custom_call.1} parent=1 // pred_fallthru
      _
    // Predicated region
    $region14: #{tpu_custom_call.1} parent=1 // pred_check
      _
    $region15: #{tpu_custom_call.1} parent=1 // pred_check_branch
      %29 = sbr.rel (0) target = $region17
    $region16: #{tpu_custom_call.1} parent=1 // pred_region
      _
    $region17: #{tpu_custom_call.1} parent=1 // pred_fallthru
      _
    // Predicated region
    $region18: #{tpu_custom_call.1} parent=1 // pred_check
      _
    $region19: #{tpu_custom_call.1} parent=1 // pred_check_branch
      %31 = sbr.rel (0) target = $region21
    $region20: #{tpu_custom_call.1} parent=1 // pred_region
      %32 = dma.done [#allocation4], 256
    $region21: #{tpu_custom_call.1} parent=1 // pred_fallthru
      _
    %v33 = vld [vmem:[#allocation3] sm:$0xff]
    %v34 = vld [vmem:[#allocation3 + $0x8] sm:$0xff]
    %v35 = vld [vmem:[%s2] sm:$0x1]
    %s36 = sld [smem:[#allocation2]]
    %v38 = vlaneseq
    %v39 = vshrl.u32 %v38, 7
    %v40 = vsub.s32 0, %v39
    %v41 = vrot.slane %v35, %v40
    %v43 = vmul.f32 %v33, %v41
    %v44 = vmul.f32 %v34, %v41
    %vm45 = vcmask 261120
    %v46 = vsel %vm45, %v43, 0.0
    %47 = vadd.xlane.f32.xlu0 %v46
    %v48 = vpop.xlane.xlu0 %47
    %v49 = vsel %vm45, %v44, 0.0
    %50 = vadd.xlane.f32.xlu0 %v49
    %v51 = vpop.xlane.xlu0 %50
    %v52 = vstv %s36
    %v53 = vadd.f32 %v48, %v52
    %v54 = vadd.f32 %v51, %v52
    %v55 = vmax.f32 %v53, 0.0
    %v56 = vmax.f32 %v54, 0.0
    %v57 = vld [vmem:[%s1] sm:$0x3]
    %v58 = vmul.f32 %v57, -10000.0
    %v60 = vlaneseq
    %v61 = vshrl.u32 %v60, 7
    %v62 = vsub.s32 0, %v61
    %v63 = vrot.slane %v58, %v62
    %65 = vbcast.lane.b32.xlu0 %v63, 256
    %v66 = vpop.permute.xlu0 %65
    %v67 = vlaneseq
    %v68 = vshrl.u32 %v67, 7
    %v69 = vsub.s32 1, %v68
    %v70 = vrot.slane %v58, %v69
    %72 = vbcast.lane.b32.xlu0 %v70, 256
    %v73 = vpop.permute.xlu0 %72
    %v76 = vadd.f32 %v55, %v66
    %v77 = vadd.f32 %v56, %v73
    %80 = vset.pattern.permute.xlu0 0
    %81 = vperm.xlu0 %80, %v76
    %v82 = vpop.permute.xlu0 %81
    %83 = vset.pattern.permute.xlu0 0
    %84 = vperm.xlu0 %83, %v77
    %v85 = vpop.permute.xlu0 %84
    %v86 = vlaneseq
    %v87 = vand.u32 %v86, 127
    %v88 = vlaneseq
    %v89 = vshrl.u32 %v88, 7
    %v90 = vsub.s32 %v87, %v89
    %v91 = vrot.slane %v82, %v90
    %v92 = vlaneseq
    %v93 = vshrl.u32 %v92, 7
    %v94 = vsub.s32 %v87, %v93
    %v95 = vrot.slane %v85, %v94
    %vm96 = vcmask 1041409
    %v97 = vsel %vm96, %v95, %v91
    %vm99 = vcmask 58368
    %v100 = vsel %vm99, %v97, -inf
    %101 = vmax.xlane.f32.xlu0 %v100
    %v102 = vpop.xlane.xlu0 %101
    %v104 = vlaneseq
    %v105 = vshrl.u32 %v104, 7
    %v106 = vsub.s32 0, %v105
    %v107 = vrot.slane %v102, %v106
    %v108 = vlaneseq
    %v109 = vshrl.u32 %v108, 7
    %v110 = vsub.s32 1, %v109
    %v111 = vrot.slane %v102, %v110
    %v114 = vsub.f32 %v76, %v107
    %v115 = vsub.f32 %v77, %v111
    %v116 = vmul.f32 %v114, 1.442695
    %v117 = vpow.pop %v116
    %v118 = vmul.f32 %v115, 1.442695
    %v119 = vpow.pop %v118
    %122 = vset.pattern.permute.xlu0 0
    %123 = vperm.xlu0 %122, %v117
    %v124 = vpop.permute.xlu0 %123
    %125 = vset.pattern.permute.xlu0 0
    %126 = vperm.xlu0 %125, %v119
    %v127 = vpop.permute.xlu0 %126
    %v128 = vlaneseq
    %v129 = vshrl.u32 %v128, 7
    %v130 = vsub.s32 %v87, %v129
    %v131 = vrot.slane %v124, %v130
    %v132 = vlaneseq
    %v133 = vshrl.u32 %v132, 7
    %v134 = vsub.s32 %v87, %v133
    %v135 = vrot.slane %v127, %v134
    %v136 = vsel %vm96, %v135, %v131
    %v138 = vsel %vm99, %v136, 0.0
    %139 = vadd.xlane.f32.xlu0 %v138
    %v140 = vpop.xlane.xlu0 %139
    %v141 = vrcp.pop %v140
    %v143 = vlaneseq
    %v144 = vshrl.u32 %v143, 7
    %v145 = vsub.s32 0, %v144
    %v146 = vrot.slane %v141, %v145
    %v147 = vlaneseq
    %v148 = vshrl.u32 %v147, 7
    %v149 = vsub.s32 1, %v148
    %v150 = vrot.slane %v141, %v149
    %v153 = vmul.f32 %v117, %v146
    %v154 = vmul.f32 %v119, %v150
    %156 = vset.pattern.permute.xlu0 0
    %157 = vperm.xlu0 %156, %v153
    %v158 = vpop.permute.xlu0 %157
    %v159 = vlaneseq
    %v160 = vshrl.u32 %v159, 7
    %v161 = vsub.s32 %v87, %v160
    %v162 = vrot.slane %v158, %v161
    %vm163 = vcmask 64512
    %v164 = vsel %vm163, %v162, 0
    %166 = vmatprep.subr.mxu0 0.0
    %167 = vmatpush1.msra.mxu0 %v33
    %168 = vmatprep.subr.mxu0 0.0
    %169 = vmatpush1.msra.mxu0 0.0
    %170 = vmatprep.subr.mxu0 0.0
    %171 = vmatpush1.msra.mxu0 0.0
    %172 = vmatprep.subr.mxu0 0.0
    %173 = vmatpush1.msra.mxu0 0.0
    %174 = vmatprep.subr.mxu0 0.0
    %175 = vmatpush1.msra.mxu0 0.0
    %176 = vmatprep.subr.mxu0 0.0
    %177 = vmatpush1.msra.mxu0 0.0
    %178 = vmatprep.subr.mxu0 0.0
    %179 = vmatpush1.msra.mxu0 0.0
    %180 = vmatprep.subr.mxu0 0.0
    %181 = vmatpush1.msra.mxu0 0.0
    %182 = vmatprep.subr.mxu0 0.0
    %183 = vmatpush1.msra.mxu0 0.0
    %184 = vmatprep.subr.mxu0 0.0
    %185 = vmatpush1.msra.mxu0 0.0
    %186 = vmatprep.subr.mxu0 0.0
    %187 = vmatpush1.msra.mxu0 0.0
    %188 = vmatprep.subr.mxu0 0.0
    %189 = vmatpush1.msra.mxu0 0.0
    %190 = vmatprep.subr.mxu0 0.0
    %191 = vmatpush1.msra.mxu0 0.0
    %192 = vmatprep.subr.mxu0 0.0
    %193 = vmatpush1.msra.mxu0 0.0
    %194 = vmatprep.subr.mxu0 0.0
    %195 = vmatpush1.msra.mxu0 0.0
    %196 = vmatprep.subr.mxu0 0.0
    %197 = vmatpush1.msra.mxu0 0.0
    %198 = vmatprep.subr.mxu0 0.0
    %199 = vmatpush1.msra.mxu0 0.0
    %200 = vmatprep.subr.mxu0 0.0
    %201 = vmatpush1.msra.mxu0 0.0
    %202 = vmatprep.subr.mxu0 0.0
    %203 = vmatpush1.msra.mxu0 0.0
    %204 = vmatprep.subr.mxu0 0.0
    %205 = vmatpush1.msra.mxu0 0.0
    %206 = vmatprep.subr.mxu0 0.0
    %207 = vmatpush1.msra.mxu0 0.0
    %208 = vmatprep.subr.mxu0 0.0
    %209 = vmatpush1.msra.mxu0 0.0
    %210 = vmatprep.subr.mxu0 0.0
    %211 = vmatpush1.msra.mxu0 0.0
    %212 = vmatprep.subr.mxu0 0.0
    %213 = vmatpush1.msra.mxu0 0.0
    %214 = vmatprep.subr.mxu0 0.0
    %215 = vmatpush1.msra.mxu0 0.0
    %216 = vmatprep.subr.mxu0 0.0
    %217 = vmatpush1.msra.mxu0 0.0
    %218 = vmatprep.subr.mxu0 0.0
    %219 = vmatpush1.msra.mxu0 0.0
    %220 = vmatprep.subr.mxu0 0.0
    %221 = vmatpush1.msra.mxu0 0.0
    %222 = vmatprep.subr.mxu0 0.0
    %223 = vmatpush1.msra.mxu0 0.0
    %224 = vmatprep.subr.mxu0 0.0
    %225 = vmatpush1.msra.mxu0 0.0
    %226 = vmatprep.subr.mxu0 0.0
    %227 = vmatpush1.msra.mxu0 0.0
    %228 = vmatprep.subr.mxu0 0.0
    %229 = vmatpush1.msra.mxu0 0.0
    %230 = vmatprep.mubr.f32.mxu0 0.0
    %231 = vmatmul.mubr.f32.gmra.mrb[0].mxu0 %v164
    %v232 = vpop.f32.mrb[0].mxu0
    %v233 = vadd.f32 0.0, %v232
    %v234 = vpop.f32.mrb[0].mxu0
    %235 = vdwg.mxu0
    %237 = vset.pattern.permute.xlu0 0
    %238 = vperm.xlu0 %237, %v154
    %v239 = vpop.permute.xlu0 %238
    %v240 = vlaneseq
    %v241 = vshrl.u32 %v240, 7
    %v242 = vsub.s32 %v87, %v241
    %v243 = vrot.slane %v239, %v242
    %v244 = vsel %vm163, %v243, 0
    %246 = vmatprep.subr.mxu0 0.0
    %247 = vmatpush1.msra.mxu0 %v34
    %248 = vmatprep.subr.mxu0 0.0
    %249 = vmatpush1.msra.mxu0 0.0
    %250 = vmatprep.subr.mxu0 0.0
    %251 = vmatpush1.msra.mxu0 0.0
    %252 = vmatprep.subr.mxu0 0.0
    %253 = vmatpush1.msra.mxu0 0.0
    %254 = vmatprep.subr.mxu0 0.0
    %255 = vmatpush1.msra.mxu0 0.0
    %256 = vmatprep.subr.mxu0 0.0
    %257 = vmatpush1.msra.mxu0 0.0
    %258 = vmatprep.subr.mxu0 0.0
    %259 = vmatpush1.msra.mxu0 0.0
    %260 = vmatprep.subr.mxu0 0.0
    %261 = vmatpush1.msra.mxu0 0.0
    %262 = vmatprep.subr.mxu0 0.0
    %263 = vmatpush1.msra.mxu0 0.0
    %264 = vmatprep.subr.mxu0 0.0
    %265 = vmatpush1.msra.mxu0 0.0
    %266 = vmatprep.subr.mxu0 0.0
    %267 = vmatpush1.msra.mxu0 0.0
    %268 = vmatprep.subr.mxu0 0.0
    %269 = vmatpush1.msra.mxu0 0.0
    %270 = vmatprep.subr.mxu0 0.0
    %271 = vmatpush1.msra.mxu0 0.0
    %272 = vmatprep.subr.mxu0 0.0
    %273 = vmatpush1.msra.mxu0 0.0
    %274 = vmatprep.subr.mxu0 0.0
    %275 = vmatpush1.msra.mxu0 0.0
    %276 = vmatprep.subr.mxu0 0.0
    %277 = vmatpush1.msra.mxu0 0.0
    %278 = vmatprep.subr.mxu0 0.0
    %279 = vmatpush1.msra.mxu0 0.0
    %280 = vmatprep.subr.mxu0 0.0
    %281 = vmatpush1.msra.mxu0 0.0
    %282 = vmatprep.subr.mxu0 0.0
    %283 = vmatpush1.msra.mxu0 0.0
    %284 = vmatprep.subr.mxu0 0.0
    %285 = vmatpush1.msra.mxu0 0.0
    %286 = vmatprep.subr.mxu0 0.0
    %287 = vmatpush1.msra.mxu0 0.0
    %288 = vmatprep.subr.mxu0 0.0
    %289 = vmatpush1.msra.mxu0 0.0
    %290 = vmatprep.subr.mxu0 0.0
    %291 = vmatpush1.msra.mxu0 0.0
    %292 = vmatprep.subr.mxu0 0.0
    %293 = vmatpush1.msra.mxu0 0.0
    %294 = vmatprep.subr.mxu0 0.0
    %295 = vmatpush1.msra.mxu0 0.0
    %296 = vmatprep.subr.mxu0 0.0
    %297 = vmatpush1.msra.mxu0 0.0
    %298 = vmatprep.subr.mxu0 0.0
    %299 = vmatpush1.msra.mxu0 0.0
    %300 = vmatprep.subr.mxu0 0.0
    %301 = vmatpush1.msra.mxu0 0.0
    %302 = vmatprep.subr.mxu0 0.0
    %303 = vmatpush1.msra.mxu0 0.0
    %304 = vmatprep.subr.mxu0 0.0
    %305 = vmatpush1.msra.mxu0 0.0
    %306 = vmatprep.subr.mxu0 0.0
    %307 = vmatpush1.msra.mxu0 0.0
    %308 = vmatprep.subr.mxu0 0.0
    %309 = vmatpush1.msra.mxu0 0.0
    %310 = vmatprep.mubr.f32.mxu0 0.0
    %311 = vmatmul.mubr.f32.gmra.mrb[0].mxu0 %v244
    %v312 = vpop.f32.mrb[0].mxu0
    %v313 = vadd.f32 0.0, %v312
    %v314 = vpop.f32.mrb[0].mxu0
    %315 = vdwg.mxu0
    %v318 = vrot.slane %v313, 7
    %v319 = vsel %vm96, %v318, %v233
    %vm321 = vcmask 254976
    %322 = vst.msk [vmem:[#allocation6] sm:$0x3] %vm321, %v319
    // Predicated region
    $region22: #{tpu_custom_call.1} parent=1 // pred_check
      _
    $region23: #{tpu_custom_call.1} parent=1 // pred_check_branch
      %324 = sbr.rel (0) target = $region25
    $region24: #{tpu_custom_call.1} parent=1 // pred_region
      %s326 = ssub.s32 32, 32
      %327 = vsyncadd [#allocation5], %s326
      %s329 = sshll.u32 [#allocation6], 4
      %s330 = int_to_ptr.vmem [resolvable:$true] %s329
      %332 = dma.vmem_to_hbm [thread:$0]  %s330, 32, %s4, [#allocation5]
    $region25: #{tpu_custom_call.1} parent=1 // pred_fallthru
      _
    // Predicated region
    $region26: #{tpu_custom_call.1} parent=1 // pred_check
      _
    $region27: #{tpu_custom_call.1} parent=1 // pred_check_branch
      %334 = sbr.rel (0) target = $region29
    $region28: #{tpu_custom_call.1} parent=1 // pred_region
      %335 = dma.done [#allocation5], 32
    $region29: #{tpu_custom_call.1} parent=1 // pred_fallthru
      _
    %336 = vsyncpa [#allocation4], 1
    %337 = vsyncpa [#allocation5], 1

</llo_original>
